<compile_context>
chip_gen: v7x
topology: tpu7x:2x2x1
jax: 0.10.0
libtpu: 0.0.40
codegen_flags: <defaults>
</compile_context>

<pallas_src>
import math
import numpy as np
import jax
import jax.numpy as jnp
from jax.experimental import pallas as pl
from jax.experimental.pallas import tpu as pltpu


def _round_up(x, m):
    return (x + m - 1) // m * m


def _cdiv(a, b):
    return -(-a // b)


def gaussian_kernel_np(k_size=3, sigma=1.0):
    center = k_size // 2
    xg, yg = np.mgrid[0 - center:k_size - center, 0 - center:k_size - center]
    gk = 1.0 / (2.0 * np.pi * sigma) * np.exp(
        -(np.square(xg) + np.square(yg)) / (2.0 * np.square(sigma)))
    return gk.astype(np.float32)


def separable_gaussian_np(k_size=3, sigma=1.0):
    # gk[i, j] == gv[i] * gh[j] exactly (in exact arithmetic)
    center = k_size // 2
    g = np.exp(-np.square(np.arange(k_size) - center) / (2.0 * sigma * sigma))
    gh = g.astype(np.float64)
    gv = (g / (2.0 * np.pi * sigma)).astype(np.float64)
    return gh, gv


def boundary_masks_np(H, W, k_size):
    # (2k, P) f32: rows 0..k-1 = column validity per dc, rows k..2k-1 = row
    # validity per dr (zero-padding boundary handling, precomputed on host).
    half = k_size // 2
    P = H * W
    pix = np.arange(P)
    row = pix // W
    col = pix % W
    cms = [((col + dc >= 0) & (col + dc < W)).astype(np.float32)
           for dc in range(-half, half + 1)]
    rms = [((row + dr >= 0) & (row + dr < H)).astype(np.float32)
           for dr in range(-half, half + 1)]
    return np.stack(cms + rms, axis=0)


# ----------------------------------------------------------------------------
# TPU-generation-aware sizing
# ----------------------------------------------------------------------------
def _vmem_capacity_bytes():
    try:
        info = pltpu.get_tpu_info()
        cap = getattr(info, "vmem_capacity_bytes", None)
        if cap:
            return int(cap)
    except Exception:
        pass
    return 64 * 1024 * 1024   # conservative (v7x per-core)


def _vmem_limit_bytes():
    cap = _vmem_capacity_bytes()
    # ~40 MiB on v7x (64 MiB/TC), 80 MiB on v5e/v6e (128 MiB)
    return max(32 * 1024 * 1024, min(int(cap * 0.625), 80 * 1024 * 1024))


def pick_pixel_tile(P, L_max, C):
    # Largest lane-dense pixel tile whose double-buffered f32 working set fits
    # a per-generation budget; then shrink to minimize P_pad padding waste.
    cap = _vmem_capacity_bytes()
    budget = max(8 * 1024 * 1024, min(int(cap * 0.5), 64 * 1024 * 1024))
    per_pix = 2 * 4 * (L_max * C + L_max + C)   # double-buffered bytes / pixel
    tp_max = (budget // per_pix) // 128 * 128
    tp_max = max(128, min(tp_max, 4096))
    n_tiles = _cdiv(P, tp_max)
    return _round_up(_cdiv(P, n_tiles), 128)


# ----------------------------------------------------------------------------
# Kernel 1: fused Communication (conf + separable smooth + threshold + ego)
# ----------------------------------------------------------------------------
def make_comm_kernel(H, W, threshold, A, k_size, sigma):
    k = k_size
    half = k // 2
    gh, gv = separable_gaussian_np(k, sigma)

    def kernel(psm_ref, ego_ref, bm_ref, mask_ref, sum_ref):
        # psm_ref: (A, NB, P)  ego_ref: (NB, 1)  bm_ref: (2k, P)
        # mask_ref: (NB, P)    sum_ref: (NB, 1)
        P = mask_ref.shape[-1]
        # channel max over the leading anchor axis (full (8,P) VPU tiles)
        m = psm_ref[0].astype(jnp.float32)
        for a in range(1, A):
            m = jnp.maximum(m, psm_ref[a].astype(jnp.float32))
        conf = jax.nn.sigmoid(m)                                   # (NB, P)

        # horizontal pass (lane rolls of +-dc, precomputed column masks)
        h = None
        for t, dc in enumerate(range(-half, half + 1)):
            w = float(gh[t])
            if dc == 0:
                term = w * conf
            else:
                cm = bm_ref[pl.ds(t, 1), :]                        # (1, P)
                term = w * (cm * pltpu.roll(conf, (-dc) % P, 1))
            h = term if h is None else h + term

        # vertical pass (lane rolls of +-dr*W, precomputed row masks)
        acc = None
        for t, dr in enumerate(range(-half, half + 1)):
            w = float(gv[t])
            if dr == 0:
                term = w * h
            else:
                rm = bm_ref[pl.ds(k + t, 1), :]                    # (1, P)
                term = w * (rm * pltpu.roll(h, (-(dr * W)) % P, 1))
            acc = term if acc is None else acc + term

        raw = jnp.where(acc > threshold, 1.0, 0.0).astype(jnp.float32)
        # per-CAV mask element count BEFORE the ego fill (communication rate)
        sum_ref[...] = jnp.sum(raw, axis=1, keepdims=True)
        # ego rows get a full mask (communication_mask[0] = 1)
        mask_ref[...] = jnp.maximum(raw, ego_ref[...])

    return kernel


def communication(psm_t, ego, bm, threshold, H, W, A, k_size, sigma, NB=8):
    # psm_t: (A, N_pad, P), ego: (N_pad, 1), bm: (2k, P)
    _, N_pad, P = psm_t.shape
    kern = make_comm_kernel(H, W, threshold, A, k_size, sigma)
    mask, sums = pl.pallas_call(
        kern,
        grid=(N_pad // NB,),
        in_specs=[pl.BlockSpec((A, NB, P), lambda n: (0, n, 0)),
                  pl.BlockSpec((NB, 1), lambda n: (n, 0)),
                  pl.BlockSpec((2 * k_size, P), lambda n: (0, 0))],
        out_specs=[pl.BlockSpec((NB, P), lambda n: (n, 0)),
                   pl.BlockSpec((NB, 1), lambda n: (n, 0))],
        out_shape=[jax.ShapeDtypeStruct((N_pad, P), jnp.float32),
                   jax.ShapeDtypeStruct((N_pad, 1), jnp.float32)],
        compiler_params=pltpu.CompilerParams(
            dimension_semantics=("parallel",)),
    )(psm_t, ego, bm)
    return mask, sums


# ----------------------------------------------------------------------------
# Kernel 2: per-pixel masked attention over CAVs (ego query), gathered tiles
# ----------------------------------------------------------------------------
def make_fusion_kernel(L_max, C):
    scale = 1.0 / math.sqrt(float(C))
    NEG = -1e30

    def kernel(idx_ref, valid_ref, *refs):
        # idx_ref / valid_ref: (B, L_max) int32 in SMEM (scalar prefetch)
        # refs: x_0..x_{L-1} (C, TP), m_0..m_{L-1} (1, TP), o_ref (C, TP)
        x_refs = refs[:L_max]
        m_refs = refs[L_max:2 * L_max]
        o_ref = refs[2 * L_max]
        b = pl.program_id(0)

        x0 = x_refs[0][...].astype(jnp.float32)                    # (C, TP)
        m0 = m_refs[0][...].astype(jnp.float32)                    # (1, TP)

        # pass 1: scores; binary mask factored out of the channel reduction
        scores = []
        for j in range(L_max):
            xj = x0 if j == 0 else x_refs[j][...].astype(jnp.float32)
            mj = m0 if j == 0 else m_refs[j][...].astype(jnp.float32)
            s = (m0 * mj) * (jnp.sum(x0 * xj, axis=0, keepdims=True) * scale)
            if j > 0:
                # padded (invalid) CAVs excluded BEFORE the max -> no den->0
                s = jnp.where(valid_ref[b, j] > 0, s, NEG)
            scores.append(s)

        smax = scores[0]
        for s in scores[1:]:
            smax = jnp.maximum(smax, s)

        # pass 2: weighted accumulation; features re-read from VMEM per CAV so
        # only x0 / smax / den / num stay live (no spill at larger L_max).
        den = jnp.zeros_like(smax)
        num = jnp.zeros_like(x0)
        for j in range(L_max):
            e = jnp.exp(scores[j] - smax)
            den = den + e
            mj = m0 if j == 0 else m_refs[j][...].astype(jnp.float32)
            xj = x0 if j == 0 else x_refs[j][...].astype(jnp.float32)
            num = num + (e * mj) * xj
        inv = pl.reciprocal(den, approx=True)
        o_ref[...] = (num * inv).astype(o_ref.dtype)

    return kernel


def fuse_groups(x_flat, mask3, cav_idx, valid, B, L_max, TP):
    # x_flat: (N, C, P_pad) f32, mask3: (N, 1, P_pad) f32
    # cav_idx / valid: (B, L_max) int32
    N, C, P_pad = x_flat.shape
    n_tiles = P_pad // TP
    kern = make_fusion_kernel(L_max, C)

    x_specs = [pl.BlockSpec((None, C, TP),
                            (lambda b, t, idx, val, j=j: (idx[b, j], 0, t)))
               for j in range(L_max)]
    m_specs = [pl.BlockSpec((None, 1, TP),
                            (lambda b, t, idx, val, j=j: (idx[b, j], 0, t)))
               for j in range(L_max)]

    return pl.pallas_call(
        kern,
        out_shape=jax.ShapeDtypeStruct((B, C, P_pad), jnp.float32),
        grid_spec=pltpu.PrefetchScalarGridSpec(
            num_scalar_prefetch=2,
            grid=(B, n_tiles),
            in_specs=x_specs + m_specs,
            out_specs=pl.BlockSpec((None, C, TP),
                                   lambda b, t, idx, val: (b, 0, t)),
        ),
        compiler_params=pltpu.CompilerParams(
            dimension_semantics=("parallel", "parallel"),
            vmem_limit_bytes=_vmem_limit_bytes()),
    )(cav_idx, valid, *([x_flat] * L_max), *([mask3] * L_max))


# ----------------------------------------------------------------------------
# Where2comm forward (eval, single-scale, partially-connected graph)
# ----------------------------------------------------------------------------
def where2comm_forward(x, psm_single, record_len, pairwise_t_matrix,
                       time_delay=None, *, threshold=0.01, k_size=3,
                       c_sigma=1.0):
    # record_len must be a host-static Python sequence (the torch reference
    # also consumes it on the host via torch.tensor_split).
    N, C, H, W = x.shape
    A = psm_single.shape[1]
    B = pairwise_t_matrix.shape[0]
    P = H * W

    record_len = [int(v) for v in record_len]
    offsets = np.concatenate([[0], np.cumsum(record_len)]).astype(np.int64)
    L_max = max(record_len)

    # ----- Communication -----------------------------------------------------
    NB = 8
    N_pad = _round_up(N, NB)
    if N_pad // NB < 2:          # >=2 parallel grid steps (v7x second core)
        N_pad = 2 * NB
    psm_t = jnp.transpose(psm_single.reshape(N, A, P), (1, 0, 2))  # (A, N, P)
    if N_pad > N:
        psm_t = jnp.pad(psm_t, ((0, 0), (0, N_pad - N), (0, 0)))
    ego_np = np.zeros((N_pad, 1), np.float32)
    ego_np[offsets[:-1], 0] = 1.0
    ego = jnp.asarray(ego_np)
    bm = jnp.asarray(boundary_masks_np(H, W, k_size))

    mask_all, sums_all = communication(psm_t, ego, bm, threshold, H, W,
                                       A, k_size, c_sigma, NB)
    mask_flat = mask_all[:N]                      # (N, P), ego already filled
    sums = sums_all[:N, 0]                        # (N,) raw per-CAV counts

    rates = []
    for b in range(B):
        s, e = int(offsets[b]), int(offsets[b + 1])
        L = e - s
        rates.append(jnp.sum(sums[s:e]) / float(L * H * W))
    communication_rates = sum(rates) / float(B)

    # ----- Masked attention fusion (gather CAV tiles straight from HBM) -----
    TP = pick_pixel_tile(P, L_max, C)
    P_pad = _round_up(P, TP)

    x_flat = x.reshape(N, C, P)
    mask3 = mask_flat.reshape(N, 1, P)
    if P_pad > P:
        x_flat = jnp.pad(x_flat, ((0, 0), (0, 0), (0, P_pad - P)))
        mask3 = jnp.pad(mask3, ((0, 0), (0, 0), (0, P_pad - P)))

    cav_idx_np = np.zeros((B, L_max), np.int32)
    valid_np = np.zeros((B, L_max), np.int32)
    for b in range(B):
        s, e = int(offsets[b]), int(offsets[b + 1])
        L = e - s
        for j in range(L_max):
            cav_idx_np[b, j] = s + j if j < L else s   # clamp padded -> ego
            valid_np[b, j] = 1 if j < L else 0
    cav_idx = jnp.asarray(cav_idx_np)
    valid = jnp.asarray(valid_np)

    fused = fuse_groups(x_flat, mask3, cav_idx, valid, B, L_max, TP)
    x_fuse = fused[:, :, :P].reshape(B, C, H, W)
    return x_fuse, communication_rates


# ----------------------------------------------------------------------------
# Pure-JAX reference for validation
# ----------------------------------------------------------------------------
def reference_forward(x, psm_single, record_len, B, gk_np, threshold):
    N, C, H, W = x.shape
    k = gk_np.shape[0]
    half = k // 2
    conf = jax.nn.sigmoid(jnp.max(psm_single, axis=1, keepdims=True))  # (N,1,H,W)
    cp = jnp.pad(conf, ((0, 0), (0, 0), (half, half), (half, half)))
    sm = jnp.zeros_like(conf)
    for i in range(k):
        for j in range(k):
            sm = sm + float(gk_np[i, j]) * cp[:, :, i:i + H, j:j + W]
    mask = jnp.where(sm > threshold, 1.0, 0.0)

    offsets = np.concatenate([[0], np.cumsum(np.asarray(record_len))])
    rates, masks = [], []
    for b in range(B):
        s, e = int(offsets[b]), int(offsets[b + 1])
        L = e - s
        mb = mask[s:e]
        rates.append(jnp.sum(mb) / float(L * H * W))
        mb = mb.at[0].set(1.0)
        masks.append(mb)
    comm_rate = sum(rates) / float(B)
    comm_mask = jnp.concatenate(masks, axis=0)

    xm = x * comm_mask
    P = H * W
    hp = jax.lax.Precision.HIGHEST
    outs = []
    for b in range(B):
        s, e = int(offsets[b]), int(offsets[b + 1])
        L = e - s
        xr = xm[s:e].reshape(L, C, P).transpose(2, 0, 1)          # (P, L, C)
        score = jnp.einsum('pic,pjc->pij', xr, xr, precision=hp) / math.sqrt(C)
        attn = jax.nn.softmax(score, axis=-1)
        ctx = jnp.einsum('pij,pjc->pic', attn, xr, precision=hp)  # (P, L, C)
        outs.append(ctx.transpose(1, 2, 0).reshape(L, C, H, W)[0])
    return jnp.stack(outs, axis=0), comm_rate


# ----------------------------------------------------------------------------
if __name__ == "__main__":
    key = jax.random.PRNGKey(0)
    k1, k2 = jax.random.split(key)

    B = 2
    record_len = [2, 3]          # CAVs per batch sample
    N = sum(record_len)          # total CAVs
    C, H, W = 32, 16, 16         # feature channels / spatial
    A = 2                        # anchor (psm) channels
    L_max = max(record_len)

    x = jax.random.normal(k1, (N, C, H, W), dtype=jnp.float32)
    psm_single = jax.random.normal(k2, (N, A, H, W), dtype=jnp.float32)
    pairwise_t_matrix = jnp.tile(jnp.eye(4, dtype=jnp.float32),
                                 (B, L_max, L_max, 1, 1))
    time_delay = jnp.zeros((N,), dtype=jnp.float32)

    threshold = 0.45   # gives a mixed 0/1 communication mask at these sizes
    x_fuse, comm_rate = where2comm_forward(
        x, psm_single, record_len, pairwise_t_matrix, time_delay,
        threshold=threshold, k_size=3, c_sigma=1.0)
    jax.block_until_ready(x_fuse)
    jax.block_until_ready(comm_rate)

    ref_fuse, ref_rate = reference_forward(
        x, psm_single, record_len, B, gaussian_kernel_np(3, 1.0), threshold)
    np.testing.assert_allclose(np.asarray(x_fuse), np.asarray(ref_fuse),
                               rtol=5e-3, atol=5e-4)
    np.testing.assert_allclose(np.asarray(comm_rate), np.asarray(ref_rate),
                               rtol=1e-6, atol=1e-6)

    print("KERNEL_OK")
</pallas_src>

<mosaic_0001>
module attributes {stable_mosaic.version = 11 : i64} {
  func.func @kernel(%arg0: i32, %arg1: memref<2x8x256xf32, #tpu.memory_space<vmem>>, %arg2: memref<8x1xf32, #tpu.memory_space<vmem>>, %arg3: memref<6x256xf32, #tpu.memory_space<vmem>>, %arg4: memref<8x256xf32, #tpu.memory_space<vmem>>, %arg5: memref<8x1xf32, #tpu.memory_space<vmem>>) attributes {dimension_semantics = [#tpu.dimension_semantics<parallel>], iteration_bounds = array<i64: 2>, scalar_prefetch = 0 : i64, scratch_operands = 0 : i64, tpu.core_type = #tpu.core_type<tc>, window_params = [{transform_indices = @transform_0, window_bounds = array<i64: 2, 8, 256>}, {transform_indices = @transform_1, window_bounds = array<i64: 8, 1>}, {pipeline_mode = #tpu.pipeline_mode<synchronous>, transform_indices = @transform_2, window_bounds = array<i64: 6, 256>}, {transform_indices = @transform_3, window_bounds = array<i64: 8, 256>}, {transform_indices = @transform_4, window_bounds = array<i64: 8, 1>}]} {
    %c0 = arith.constant 0 : index
    %c0_0 = arith.constant 0 : index
    %c0_1 = arith.constant 0 : index
    %0 = vector.load %arg1[%c0, %c0_0, %c0_1] : memref<2x8x256xf32, #tpu.memory_space<vmem>>, vector<1x8x256xf32>
    %1 = vector.shape_cast %0 : vector<1x8x256xf32> to vector<8x256xf32>
    %c1 = arith.constant 1 : index
    %c0_2 = arith.constant 0 : index
    %c0_3 = arith.constant 0 : index
    %2 = vector.load %arg1[%c1, %c0_2, %c0_3] : memref<2x8x256xf32, #tpu.memory_space<vmem>>, vector<1x8x256xf32>
    %3 = vector.shape_cast %2 : vector<1x8x256xf32> to vector<8x256xf32>
    %4 = arith.maximumf %1, %3 : vector<8x256xf32>
    %5 = arith.negf %4 : vector<8x256xf32>
    %6 = math.exp %5 : vector<8x256xf32>
    %cst = arith.constant 1.000000e+00 : f32
    %7 = vector.broadcast %cst : f32 to vector<8x256xf32>
    %8 = arith.addf %7, %6 : vector<8x256xf32>
    %9 = arith.divf %7, %8 : vector<8x256xf32>
    %c0_4 = arith.constant 0 : index
    %c0_5 = arith.constant 0 : index
    %10 = vector.load %arg3[%c0_4, %c0_5] : memref<6x256xf32, #tpu.memory_space<vmem>>, vector<1x256xf32>
    %c1_i32 = arith.constant 1 : i32
    %11 = tpu.dynamic_rotate %9 by %c1_i32 dim 1 : vector<8x256xf32>, i32 -> vector<8x256xf32>
    %12 = vector.broadcast %10 : vector<1x256xf32> to vector<8x256xf32>
    %13 = arith.mulf %12, %11 : vector<8x256xf32>
    %cst_6 = arith.constant 0.606530666 : f32
    %14 = vector.broadcast %cst_6 : f32 to vector<8x256xf32>
    %15 = arith.mulf %14, %13 : vector<8x256xf32>
    %cst_7 = arith.constant 1.000000e+00 : f32
    %16 = vector.broadcast %cst_7 : f32 to vector<8x256xf32>
    %17 = arith.mulf %16, %9 : vector<8x256xf32>
    %18 = arith.addf %15, %17 : vector<8x256xf32>
    %c2 = arith.constant 2 : index
    %c0_8 = arith.constant 0 : index
    %19 = vector.load %arg3[%c2, %c0_8] : memref<6x256xf32, #tpu.memory_space<vmem>>, vector<1x256xf32>
    %c255_i32 = arith.constant 255 : i32
    %20 = tpu.dynamic_rotate %9 by %c255_i32 dim 1 : vector<8x256xf32>, i32 -> vector<8x256xf32>
    %21 = vector.broadcast %19 : vector<1x256xf32> to vector<8x256xf32>
    %22 = arith.mulf %21, %20 : vector<8x256xf32>
    %cst_9 = arith.constant 0.606530666 : f32
    %23 = vector.broadcast %cst_9 : f32 to vector<8x256xf32>
    %24 = arith.mulf %23, %22 : vector<8x256xf32>
    %25 = arith.addf %18, %24 : vector<8x256xf32>
    %c3 = arith.constant 3 : index
    %c0_10 = arith.constant 0 : index
    %26 = vector.load %arg3[%c3, %c0_10] : memref<6x256xf32, #tpu.memory_space<vmem>>, vector<1x256xf32>
    %c16_i32 = arith.constant 16 : i32
    %27 = tpu.dynamic_rotate %25 by %c16_i32 dim 1 : vector<8x256xf32>, i32 -> vector<8x256xf32>
    %28 = vector.broadcast %26 : vector<1x256xf32> to vector<8x256xf32>
    %29 = arith.mulf %28, %27 : vector<8x256xf32>
    %cst_11 = arith.constant 0.0965323522 : f32
    %30 = vector.broadcast %cst_11 : f32 to vector<8x256xf32>
    %31 = arith.mulf %30, %29 : vector<8x256xf32>
    %cst_12 = arith.constant 0.159154937 : f32
    %32 = vector.broadcast %cst_12 : f32 to vector<8x256xf32>
    %33 = arith.mulf %32, %25 : vector<8x256xf32>
    %34 = arith.addf %31, %33 : vector<8x256xf32>
    %c5 = arith.constant 5 : index
    %c0_13 = arith.constant 0 : index
    %35 = vector.load %arg3[%c5, %c0_13] : memref<6x256xf32, #tpu.memory_space<vmem>>, vector<1x256xf32>
    %c240_i32 = arith.constant 240 : i32
    %36 = tpu.dynamic_rotate %25 by %c240_i32 dim 1 : vector<8x256xf32>, i32 -> vector<8x256xf32>
    %37 = vector.broadcast %35 : vector<1x256xf32> to vector<8x256xf32>
    %38 = arith.mulf %37, %36 : vector<8x256xf32>
    %cst_14 = arith.constant 0.0965323522 : f32
    %39 = vector.broadcast %cst_14 : f32 to vector<8x256xf32>
    %40 = arith.mulf %39, %38 : vector<8x256xf32>
    %41 = arith.addf %34, %40 : vector<8x256xf32>
    %cst_15 = arith.constant 4.500000e-01 : f32
    %42 = vector.broadcast %cst_15 : f32 to vector<8x256xf32>
    %43 = arith.cmpf ogt, %41, %42 : vector<8x256xf32>
    %cst_16 = arith.constant 1.000000e+00 : f32
    %cst_17 = arith.constant 0.000000e+00 : f32
    %44 = vector.broadcast %cst_16 : f32 to vector<8x256xf32>
    %45 = vector.broadcast %cst_17 : f32 to vector<8x256xf32>
    %46 = arith.select %43, %44, %45 : vector<8x256xi1>, vector<8x256xf32>
    %cst_18 = arith.constant dense<0.000000e+00> : vector<8xf32>
    %47 = vector.multi_reduction <add>, %46, %cst_18 [1] : vector<8x256xf32> to vector<8xf32>
    %48 = vector.shape_cast %47 : vector<8xf32> to vector<8x1xf32>
    %c0_19 = arith.constant 0 : index
    %c0_20 = arith.constant 0 : index
    %49 = vector.load %arg5[%c0_19, %c0_20] : memref<8x1xf32, #tpu.memory_space<vmem>>, vector<8x1xf32>
    tpu.vector_store %arg5[%c0_19, %c0_20], %48 {strides = array<i32>} : memref<8x1xf32, #tpu.memory_space<vmem>>, vector<8x1xf32>,
    %c0_21 = arith.constant 0 : index
    %c0_22 = arith.constant 0 : index
    %50 = vector.load %arg2[%c0_21, %c0_22] : memref<8x1xf32, #tpu.memory_space<vmem>>, vector<8x1xf32>
    %51 = vector.broadcast %50 : vector<8x1xf32> to vector<8x256xf32>
    %52 = arith.maximumf %46, %51 : vector<8x256xf32>
    %c0_23 = arith.constant 0 : index
    %c0_24 = arith.constant 0 : index
    %53 = vector.load %arg4[%c0_23, %c0_24] : memref<8x256xf32, #tpu.memory_space<vmem>>, vector<8x256xf32>
    tpu.vector_store %arg4[%c0_23, %c0_24], %52 {strides = array<i32>} : memref<8x256xf32, #tpu.memory_space<vmem>>, vector<8x256xf32>,
    return
  }
  func.func @transform_0(%arg0: i32) -> (i32, i32, i32) {
    %c0_i32 = arith.constant 0 : i32
    %c0_i32_0 = arith.constant 0 : i32
    %c0_i32_1 = arith.constant 0 : i32
    return %c0_i32, %arg0, %c0_i32_0 : i32, i32, i32
  }
  func.func @transform_1(%arg0: i32) -> (i32, i32) {
    %c0_i32 = arith.constant 0 : i32
    %c0_i32_0 = arith.constant 0 : i32
    return %arg0, %c0_i32 : i32, i32
  }
  func.func @transform_2(%arg0: i32) -> (i32, i32) {
    %c0_i32 = arith.constant 0 : i32
    %c0_i32_0 = arith.constant 0 : i32
    %c0_i32_1 = arith.constant 0 : i32
    return %c0_i32, %c0_i32_0 : i32, i32
  }
  func.func @transform_3(%arg0: i32) -> (i32, i32) {
    %c0_i32 = arith.constant 0 : i32
    %c0_i32_0 = arith.constant 0 : i32
    return %arg0, %c0_i32 : i32, i32
  }
  func.func @transform_4(%arg0: i32) -> (i32, i32) {
    %c0_i32 = arith.constant 0 : i32
    %c0_i32_0 = arith.constant 0 : i32
    return %arg0, %c0_i32 : i32, i32
  }
}

</mosaic_0001>

<llo_original>
// kernel: tpu_custom_call.1
$region0: #{tpu_custom_call.1}
  #allocation0 [shape = 'u32[]', space=smem, size = 0x4, offset = 0x4, fixed_abs, tag = 'smem constant byte address 0x4 - core index']
  #allocation1 [shape = 'u32[144,128]{1,0:T(1,128)}', space=vmem, size = 0x12000, scoped, tag = 'internal scratch']
  %s0 = inlined_call_operand.hbm [shape: f32[2,16,256], index: 0, kind: input, shape index: {}]
  %s1 = inlined_call_operand.vmem [shape: f32[16,1], index: 1, kind: input, shape index: {}]
  %s2 = inlined_call_operand.vmem [shape: f32[6,256], index: 2, kind: input, shape index: {}]
  %s3 = inlined_call_operand.hbm [shape: f32[16,256], index: 3, kind: output, shape index: {0}]
  %s4 = inlined_call_operand.vmem [shape: f32[16,1], index: 4, kind: output, shape index: {1}]
  %5 = xla_tuple %s3, %s4
  %s6 = sld [smem:[#allocation0]]
  $region57: #{tpu_custom_call.1} parent=0
    _
  %s8 = ssub.s32 1, %s6
  %s9 = scalar_select 0, %s8, %s6
  $region1: #{tpu_custom_call.1} parent=0
    #allocation2 [shape = 'u8[32768]{0}', space=vmem, size = 0x8000, scoped, tag = 'input window, operand 0']
    #allocation3 [shape = 's32[2]{0}', space=sflag, size = 0x8, scoped, tag = 'scoped memory for tpu_custom_call.1']
    #allocation4 [shape = 's32[2]{0}', space=sflag, size = 0x8, scoped, tag = 'scoped memory for tpu_custom_call.1']
    #allocation5 [shape = 'u8[16384]{0}', space=vmem, size = 0x4000, scoped, tag = 'output window, operand 0']
    %10 = vsyncpa [#allocation3], 0
    %s11 = scalar_lea.sflag [#allocation3], 1
    %12 = vsyncpa %s11, 0
    %13 = vsyncpa [#allocation4], 0
    %s14 = scalar_lea.sflag [#allocation4], 1
    %15 = vsyncpa %s14, 0
    loop: start=0, step=1, limit=4
    $region2: #{tpu_custom_call.1} parent=1 // loop_pre_header
      _
    $region3: #{tpu_custom_call.1} parent=1 // loop_header
      %s17 = sphi 0, %s21
      %p18 = scmp.ge.s32.totalorder %s17, 4
      %s27 = sphi 0, %s29
      %s30 = sphi 0, %s27
      %s31 = sphi 0, %s30
      %s47 = sphi 0, %s31
      %s53 = sphi 0, %s55
      %s56 = sphi 0, %s53
      %s57 = sphi 0, %s56
      %s73 = sphi 0, %s57
      %s77 = sphi 0, %s77
      %s79 = sphi 0, %s77
      %s80 = sphi 0, %s79
      %s94 = sphi 0, %s80
      %s100 = sphi 0, %s102
      %s103 = sphi 0, %s100
      %s104 = sphi 0, %s103
      %s120 = sphi 0, %s104
      %s126 = sphi 0, %s128
      %s129 = sphi 0, %s126
      %s130 = sphi 0, %s129
      %s146 = sphi 0, %s130
    $region4: #{tpu_custom_call.1} parent=1 // loop_header_branch
      %20 = sbr.rel (%p18) target = $region8
    $region5: #{tpu_custom_call.1} parent=1 // loop_body
      %s22 = ssub.s32 %s17, 1
      %s23 = ssub.s32 %s17, 2
      %s24 = sadd.s32 %s17, 1
      %s25 = ssub.s32 %s17, %s24
      %p26 = scmp.eq.s32.totalorder %s25, 0
      %s28 = sadd.s32 %s27, 1
      %s29 = scalar_select %p26, %s27, %s28
      %p32 = pneg %p26
      %p33 = scmp.eq.s32.totalorder %s17, 1
      %p34 = por %p32, %p33
      %p35 = scmp.ne.s32.totalorder %s27, %s30
      %p36 = scmp.eq.s32.totalorder %s17, 0
      %p37 = por %p35, %p36
      %p38 = scmp.ne.s32.totalorder %s27, %s30
      %p39 = scmp.eq.s32.totalorder %s22, 1
      %p40 = por %p38, %p39
      %p41 = scmp.ne.s32.totalorder %s30, %s31
      %p42 = scmp.eq.s32.totalorder %s22, 0
      %p43 = por %p41, %p42
      %p44 = scmp.ne.s32.totalorder %s30, %s31
      %p45 = scmp.eq.s32.totalorder %s23, 1
      %p46 = por %p44, %p45
      %p48 = scmp.ne.s32.totalorder %s31, %s47
      %p49 = scmp.eq.s32.totalorder %s23, 0
      %p50 = por %p48, %p49
      %s51 = ssub.s32 %s17, %s24
      %p52 = scmp.eq.s32.totalorder %s51, 0
      %s54 = sadd.s32 %s53, 1
      %s55 = scalar_select %p52, %s53, %s54
      %p58 = pneg %p52
      %p59 = scmp.eq.s32.totalorder %s17, 1
      %p60 = por %p58, %p59
      %p61 = scmp.ne.s32.totalorder %s53, %s56
      %p62 = scmp.eq.s32.totalorder %s17, 0
      %p63 = por %p61, %p62
      %p64 = scmp.ne.s32.totalorder %s53, %s56
      %p65 = scmp.eq.s32.totalorder %s22, 1
      %p66 = por %p64, %p65
      %p67 = scmp.ne.s32.totalorder %s56, %s57
      %p68 = scmp.eq.s32.totalorder %s22, 0
      %p69 = por %p67, %p68
      %p70 = scmp.ne.s32.totalorder %s56, %s57
      %p71 = scmp.eq.s32.totalorder %s23, 1
      %p72 = por %p70, %p71
      %p74 = scmp.ne.s32.totalorder %s57, %s73
      %p75 = scmp.eq.s32.totalorder %s23, 0
      %p76 = por %p74, %p75
      %s78 = sadd.s32 %s77, 1
      %p81 = scmp.eq.s32.totalorder %s17, 1
      %p82 = scmp.ne.s32.totalorder %s77, %s79
      %p83 = scmp.eq.s32.totalorder %s17, 0
      %p84 = por %p82, %p83
      %p85 = scmp.ne.s32.totalorder %s77, %s79
      %p86 = scmp.eq.s32.totalorder %s22, 1
      %p87 = por %p85, %p86
      %p88 = scmp.ne.s32.totalorder %s79, %s80
      %p89 = scmp.eq.s32.totalorder %s22, 0
      %p90 = por %p88, %p89
      %p91 = scmp.ne.s32.totalorder %s79, %s80
      %p92 = scmp.eq.s32.totalorder %s23, 1
      %p93 = por %p91, %p92
      %p95 = scmp.ne.s32.totalorder %s80, %s94
      %p96 = scmp.eq.s32.totalorder %s23, 0
      %p97 = por %p95, %p96
      %s98 = ssub.s32 %s17, %s24
      %p99 = scmp.eq.s32.totalorder %s98, 0
      %s101 = sadd.s32 %s100, 1
      %s102 = scalar_select %p99, %s100, %s101
      %p105 = pneg %p99
      %p106 = scmp.eq.s32.totalorder %s17, 1
      %p107 = por %p105, %p106
      %p108 = scmp.ne.s32.totalorder %s100, %s103
      %p109 = scmp.eq.s32.totalorder %s17, 0
      %p110 = por %p108, %p109
      %p111 = scmp.ne.s32.totalorder %s100, %s103
      %p112 = scmp.eq.s32.totalorder %s22, 1
      %p113 = por %p111, %p112
      %p114 = scmp.ne.s32.totalorder %s103, %s104
      %p115 = scmp.eq.s32.totalorder %s22, 0
      %p116 = por %p114, %p115
      %p117 = scmp.ne.s32.totalorder %s103, %s104
      %p118 = scmp.eq.s32.totalorder %s23, 1
      %p119 = por %p117, %p118
      %p121 = scmp.ne.s32.totalorder %s104, %s120
      %p122 = scmp.eq.s32.totalorder %s23, 0
      %p123 = por %p121, %p122
      %s124 = ssub.s32 %s17, %s24
      %p125 = scmp.eq.s32.totalorder %s124, 0
      %s127 = sadd.s32 %s126, 1
      %s128 = scalar_select %p125, %s126, %s127
      %p131 = pneg %p125
      %p132 = scmp.eq.s32.totalorder %s17, 1
      %p133 = por %p131, %p132
      %p134 = scmp.ne.s32.totalorder %s126, %s129
      %p135 = scmp.eq.s32.totalorder %s17, 0
      %p136 = por %p134, %p135
      %p137 = scmp.ne.s32.totalorder %s126, %s129
      %p138 = scmp.eq.s32.totalorder %s22, 1
      %p139 = por %p137, %p138
      %p140 = scmp.ne.s32.totalorder %s129, %s130
      %p141 = scmp.eq.s32.totalorder %s22, 0
      %p142 = por %p140, %p141
      %p143 = scmp.ne.s32.totalorder %s129, %s130
      %p144 = scmp.eq.s32.totalorder %s23, 1
      %p145 = por %p143, %p144
      %p147 = scmp.ne.s32.totalorder %s130, %s146
      %p148 = scmp.eq.s32.totalorder %s23, 0
      %p149 = por %p147, %p148
      %p150 = scmp.le.s32.totalorder 1, %s17
      %p151 = scmp.lt.s32.totalorder %s17, 3
      %p152 = pnand %p150, %p151
      %p153 = pneg %p152
      // Predicated region
      $region9: #{tpu_custom_call.1} parent=5 // pred_check
        _
      $region10: #{tpu_custom_call.1} parent=5 // pred_check_branch
        %155 = sbr.rel (%p152) target = $region12
      $region11: #{tpu_custom_call.1} parent=5 // pred_region
        %s156 = ssub.s32 %s17, 1
        // Predicated region
        $region13: #{tpu_custom_call.1} parent=11 // pred_check
          %p157 = pneg %p90
        $region14: #{tpu_custom_call.1} parent=11 // pred_check_branch
          %159 = sbr.rel (%p157) target = $region16
        $region15: #{tpu_custom_call.1} parent=11 // pred_region
          _
        $region16: #{tpu_custom_call.1} parent=11 // pred_fallthru
          _
      $region12: #{tpu_custom_call.1} parent=5 // pred_fallthru
        _
      %p160 = scmp.lt.s32.totalorder %s17, 2
      // Predicated region
      $region17: #{tpu_custom_call.1} parent=5 // pred_check
        %p161 = pneg %p160
      $region18: #{tpu_custom_call.1} parent=5 // pred_check_branch
        %163 = sbr.rel (%p161) target = $region20
      $region19: #{tpu_custom_call.1} parent=5 // pred_region
        // Predicated region
        $region21: #{tpu_custom_call.1} parent=19 // pred_check
          %p164 = pneg %p37
        $region22: #{tpu_custom_call.1} parent=19 // pred_check_branch
          %166 = sbr.rel (%p164) target = $region24
        $region23: #{tpu_custom_call.1} parent=19 // pred_region
          %s167 = sand.u32 %s27, 1
          %s168 = scalar_lea.sflag [#allocation3], %s167
          %s169 = sand.u32 %s27, 1
          %s170 = smul.addr %s169, 32
          %s171 = scalar_lea.vmem [#allocation2], %s170
          %s173 = ssub.s32 512, 512
          %174 = vsyncadd %s168, %s173
          %s175 = smul.addr %s17, 2
          %s176 = smul.addr %s175, 128
          %s177 = scalar_lea.hbm %s0, %s176
          %s178 = sshll.u32 %s171, 4
          %s179 = int_to_ptr.vmem [resolvable:$true] %s178
          %184 = dma.hbm_to_vmem [thread:$0]  %s177, 512, %s179, %s168, 512, 256, 16
        $region24: #{tpu_custom_call.1} parent=19 // pred_fallthru
          _
        // Predicated region
        $region25: #{tpu_custom_call.1} parent=19 // pred_check
          %p185 = pneg %p63
        $region26: #{tpu_custom_call.1} parent=19 // pred_check_branch
          %187 = sbr.rel (%p185) target = $region28
        $region27: #{tpu_custom_call.1} parent=19 // pred_region
          %p188 = scmp.lt.s32.totalorder %s17, 1
          %s189 = scalar_select %p188, %s17, 1
          %s190 = smul.addr %s189, 8
          %s191 = scalar_lea.vmem %s1, %s190
        $region28: #{tpu_custom_call.1} parent=19 // pred_fallthru
          _
      $region20: #{tpu_custom_call.1} parent=5 // pred_fallthru
        _
      %p192 = scmp.le.s32.totalorder 1, %s17
      %p193 = scmp.lt.s32.totalorder %s17, 3
      %p194 = pnand %p192, %p193
      %p195 = pneg %p194
      // Predicated region
      $region29: #{tpu_custom_call.1} parent=5 // pred_check
        _
      $region30: #{tpu_custom_call.1} parent=5 // pred_check_branch
        %197 = sbr.rel (%p194) target = $region32
      $region31: #{tpu_custom_call.1} parent=5 // pred_region
        %s198 = ssub.s32 %s17, 1
        %s199 = sand.u32 %s30, 1
        %s200 = scalar_lea.sflag [#allocation3], %s199
        %s201 = sand.u32 %s30, 1
        %s202 = smul.addr %s201, 32
        %s203 = scalar_lea.vmem [#allocation2], %s202
        // Predicated region
        $region33: #{tpu_custom_call.1} parent=31 // pred_check
          %p204 = pneg %p43
        $region34: #{tpu_custom_call.1} parent=31 // pred_check_branch
          %206 = sbr.rel (%p204) target = $region36
        $region35: #{tpu_custom_call.1} parent=31 // pred_region
          %207 = dma.done %s200, 512
        $region36: #{tpu_custom_call.1} parent=31 // pred_fallthru
          _
        %s208 = sand.u32 %s30, 1
        %s209 = scalar_lea.sflag [#allocation3], %s208
        %s210 = sand.u32 %s30, 1
        %s211 = smul.addr %s210, 32
        %s212 = scalar_lea.vmem [#allocation2], %s211
        %p213 = pneg %p43
        %p214 = pneg %p40
        %p215 = scmp.lt.s32.totalorder %s22, 1
        %s216 = scalar_select %p215, %s22, 1
        %s217 = smul.addr %s216, 8
        %s218 = scalar_lea.vmem %s1, %s217
        %p219 = pneg %p69
        %p220 = pneg %p66
        %p221 = pneg %p90
        %p222 = pneg %p87
        %p223 = pneg %p116
        %p224 = pneg %p113
        %s225 = sand.u32 %s103, 1
        %s226 = scalar_lea.sflag [#allocation4], %s225
        %s227 = sand.u32 %s103, 1
        %s228 = smul.addr %s227, 16
        %s229 = scalar_lea.vmem [#allocation5], %s228
        %p230 = pneg %p142
        %p231 = pneg %p139
        %p232 = scmp.lt.s32.totalorder %s22, 1
        %s233 = scalar_select %p232, %s22, 1
        %s234 = smul.addr %s233, 8
        %s235 = scalar_lea.vmem %s4, %s234
        %p236 = scmp.lt.s32.totalorder %s22, 1
        %s237 = scalar_select %p236, %s22, 1
        %s238 = smul.addr %s237, 8
        %s239 = scalar_lea.vmem %s1, %s238
        %p240 = scmp.lt.s32.totalorder %s22, 1
        %s241 = scalar_select %p240, %s22, 1
        %s242 = smul.addr %s241, 8
        %s243 = scalar_lea.vmem %s4, %s242
        %v244 = vld [vmem:[%s203] sm:$0xff]
        %v245 = vld [vmem:[%s203 + $0x8] sm:$0xff]
        %s246 = scalar_lea.vmem %s203, 16 [#allocation2]
        %v247 = vld [vmem:[%s246] sm:$0xff]
        %v248 = vld [vmem:[%s246 + $0x8] sm:$0xff]
        %v249 = vmax.f32 %v244, %v247
        %v250 = vmax.f32 %v245, %v248
        %v251 = vxor.u32 %v249, 2147483648
        %v252 = vxor.u32 %v250, 2147483648
        %v253 = vmul.f32 %v251, 1.442695
        %v254 = vpow.pop %v253
        %v255 = vmul.f32 %v252, 1.442695
        %v256 = vpow.pop %v255
        %v257 = vadd.f32 %v254, 1.0
        %v258 = vadd.f32 %v256, 1.0
        %v259 = vrcp.pop %v257
        %v260 = vmul.f32 1.0, %v259
        %v261 = vrcp.pop %v258
        %v262 = vmul.f32 1.0, %v261
        %v263 = vld [vmem:[%s2] ss:$8 sm:$0x3]
        %264 = vrot.lane.b32.xlu0 %v260, 1
        %v265 = vpop.permute.xlu0 %264
        %266 = vrot.lane.b32.xlu0 %v262, 1
        %v267 = vpop.permute.xlu0 %266
        %v268 = vlaneseq
        %v269 = vand.u32 %v268, 127
        %vm270 = vcmp.lt.s32.totalorder %v269, 1
        %v271 = vsel %vm270, %v265, %v267
        %v272 = vsel %vm270, %v267, %v265
        %v274 = vlaneseq
        %v275 = vshrl.u32 %v274, 7
        %v276 = vsub.s32 0, %v275
        %v277 = vrot.slane %v263, %v276
        %v278 = vlaneseq
        %v279 = vshrl.u32 %v278, 7
        %v280 = vsub.s32 1, %v279
        %v281 = vrot.slane %v263, %v280
        %v284 = vmul.f32 %v277, %v272
        %v285 = vmul.f32 %v281, %v271
        %v286 = vmul.f32 %v284, 0.60653067
        %v287 = vmul.f32 %v285, 0.60653067
        %v288 = vadd.f32 %v286, %v260
        %v289 = vadd.f32 %v287, %v262
        %s290 = scalar_lea.vmem %s2, 2
        %v291 = vld [vmem:[%s290] ss:$8 sm:$0x3]
        %292 = vrot.lane.b32.xlu0 %v260, 127
        %v293 = vpop.permute.xlu0 %292
        %294 = vrot.lane.b32.xlu0 %v262, 127
        %v295 = vpop.permute.xlu0 %294
        %vm296 = vcmp.lt.s32.totalorder %v269, 127
        %v297 = vsel %vm296, %v293, %v295
        %v298 = vsel %vm296, %v295, %v293
        %v300 = vlaneseq
        %v301 = vshrl.u32 %v300, 7
        %v302 = vsub.s32 0, %v301
        %v303 = vrot.slane %v291, %v302
        %v304 = vlaneseq
        %v305 = vshrl.u32 %v304, 7
        %v306 = vsub.s32 1, %v305
        %v307 = vrot.slane %v291, %v306
        %v310 = vmul.f32 %v303, %v297
        %v311 = vmul.f32 %v307, %v298
        %v312 = vmul.f32 %v310, 0.60653067
        %v313 = vmul.f32 %v311, 0.60653067
        %v314 = vadd.f32 %v288, %v312
        %v315 = vadd.f32 %v289, %v313
        %s316 = scalar_lea.vmem %s2, 3
        %v317 = vld [vmem:[%s316] ss:$8 sm:$0x3]
        %318 = vrot.lane.b32.xlu0 %v314, 16
        %v319 = vpop.permute.xlu0 %318
        %320 = vrot.lane.b32.xlu0 %v315, 16
        %v321 = vpop.permute.xlu0 %320
        %vm322 = vcmp.lt.s32.totalorder %v269, 16
        %v323 = vsel %vm322, %v319, %v321
        %v324 = vsel %vm322, %v321, %v319
        %v326 = vlaneseq
        %v327 = vshrl.u32 %v326, 7
        %v328 = vsub.s32 0, %v327
        %v329 = vrot.slane %v317, %v328
        %v330 = vlaneseq
        %v331 = vshrl.u32 %v330, 7
        %v332 = vsub.s32 1, %v331
        %v333 = vrot.slane %v317, %v332
        %v336 = vmul.f32 %v329, %v324
        %v337 = vmul.f32 %v333, %v323
        %v338 = vmul.f32 %v336, 0.09653235
        %v339 = vmul.f32 %v337, 0.09653235
        %v340 = vmul.f32 %v314, 0.15915494
        %v341 = vmul.f32 %v315, 0.15915494
        %v342 = vadd.f32 %v338, %v340
        %v343 = vadd.f32 %v339, %v341
        %s344 = scalar_lea.vmem %s2, 5
        %v345 = vld [vmem:[%s344] ss:$8 sm:$0x3]
        %346 = vrot.lane.b32.xlu0 %v314, 112
        %v347 = vpop.permute.xlu0 %346
        %348 = vrot.lane.b32.xlu0 %v315, 112
        %v349 = vpop.permute.xlu0 %348
        %vm350 = vcmp.lt.s32.totalorder %v269, 112
        %v351 = vsel %vm350, %v347, %v349
        %v352 = vsel %vm350, %v349, %v347
        %v354 = vlaneseq
        %v355 = vshrl.u32 %v354, 7
        %v356 = vsub.s32 0, %v355
        %v357 = vrot.slane %v345, %v356
        %v358 = vlaneseq
        %v359 = vshrl.u32 %v358, 7
        %v360 = vsub.s32 1, %v359
        %v361 = vrot.slane %v345, %v360
        %v364 = vmul.f32 %v357, %v351
        %v365 = vmul.f32 %v361, %v352
        %v366 = vmul.f32 %v364, 0.09653235
        %v367 = vmul.f32 %v365, 0.09653235
        %v368 = vadd.f32 %v342, %v366
        %v369 = vadd.f32 %v343, %v367
        %vm370 = vcmp.gt.f32.partialorder %v368, 0.45
        %vm371 = vcmp.gt.f32.partialorder %v369, 0.45
        %v372 = vsel %vm370, 1.0, 0.0
        %v373 = vsel %vm371, 1.0, 0.0
        %v374 = vadd.f32 %v372, %v373
        %375 = vadd.xlane.f32.xlu0 %v374
        %v376 = vpop.xlane.xlu0 %375
        %vm377 = vcmask 7168
        %378 = vst.msk [vmem:[%s243] sm:$0xff] %vm377, %v376
        %v379 = vld [vmem:[%s239] sm:$0xff]
        %381 = vset.pattern.permute.xlu0 0
        %382 = vperm.xlu0 %381, %v379
        %v383 = vpop.permute.xlu0 %382
        %v385 = vmax.f32 %v372, %v383
        %v386 = vmax.f32 %v373, %v383
        %387 = vst [vmem:[%s229] sm:$0xff] %v385
        %388 = vst [vmem:[%s229 + $0x8] sm:$0xff] %v386
        %s389 = sand.u32 %s103, 1
        %s390 = scalar_lea.sflag [#allocation4], %s389
        %s391 = sand.u32 %s103, 1
        %s392 = smul.addr %s391, 16
        %s393 = scalar_lea.vmem [#allocation5], %s392
        %p394 = scmp.lt.s32.totalorder %s22, 1
        %s395 = scalar_select %p394, %s22, 1
        %s396 = smul.addr %s395, 8
        %s397 = scalar_lea.vmem %s4, %s396
        // Predicated region
        $region37: #{tpu_custom_call.1} parent=31 // pred_check
          %p398 = pneg %p113
        $region38: #{tpu_custom_call.1} parent=31 // pred_check_branch
          %400 = sbr.rel (%p398) target = $region40
        $region39: #{tpu_custom_call.1} parent=31 // pred_region
          %s402 = ssub.s32 256, 256
          %403 = vsyncadd %s390, %s402
          %s404 = smul.addr %s22, 2
          %s405 = smul.addr %s404, 128
          %s406 = scalar_lea.hbm %s3, %s405
          %s408 = sshll.u32 %s393, 4
          %s409 = int_to_ptr.vmem [resolvable:$true] %s408
          %411 = dma.vmem_to_hbm [thread:$0]  %s409, 256, %s406, %s390
        $region40: #{tpu_custom_call.1} parent=31 // pred_fallthru
          _
        // Predicated region
        $region41: #{tpu_custom_call.1} parent=31 // pred_check
          %p412 = pneg %p139
        $region42: #{tpu_custom_call.1} parent=31 // pred_check_branch
          %414 = sbr.rel (%p412) target = $region44
        $region43: #{tpu_custom_call.1} parent=31 // pred_region
          _
        $region44: #{tpu_custom_call.1} parent=31 // pred_fallthru
          _
      $region32: #{tpu_custom_call.1} parent=5 // pred_fallthru
        _
      %p415 = scmp.le.s32.totalorder 2, %s17
      // Predicated region
      $region45: #{tpu_custom_call.1} parent=5 // pred_check
        %p416 = pneg %p415
      $region46: #{tpu_custom_call.1} parent=5 // pred_check_branch
        %418 = sbr.rel (%p416) target = $region48
      $region47: #{tpu_custom_call.1} parent=5 // pred_region
        %s419 = ssub.s32 %s17, 2
        // Predicated region
        $region49: #{tpu_custom_call.1} parent=47 // pred_check
          %p420 = pneg %p119
        $region50: #{tpu_custom_call.1} parent=47 // pred_check_branch
          %422 = sbr.rel (%p420) target = $region52
        $region51: #{tpu_custom_call.1} parent=47 // pred_region
          %s423 = sand.u32 %s104, 1
          %s424 = scalar_lea.sflag [#allocation4], %s423
          %s425 = sand.u32 %s104, 1
          %s426 = smul.addr %s425, 16
          %s427 = scalar_lea.vmem [#allocation5], %s426
          %428 = dma.done %s424, 256
        $region52: #{tpu_custom_call.1} parent=47 // pred_fallthru
          _
        // Predicated region
        $region53: #{tpu_custom_call.1} parent=47 // pred_check
          %p429 = pneg %p145
        $region54: #{tpu_custom_call.1} parent=47 // pred_check_branch
          %431 = sbr.rel (%p429) target = $region56
        $region55: #{tpu_custom_call.1} parent=47 // pred_region
          %p432 = scmp.lt.s32.totalorder %s23, 1
          %s433 = scalar_select %p432, %s23, 1
          %s434 = smul.addr %s433, 8
          %s435 = scalar_lea.vmem %s4, %s434
        $region56: #{tpu_custom_call.1} parent=47 // pred_fallthru
          _
      $region48: #{tpu_custom_call.1} parent=5 // pred_fallthru
        _
    $region6: #{tpu_custom_call.1} parent=1 // loop_footer
      %s21 = sadd.s32 1, %s17
    $region7: #{tpu_custom_call.1} parent=1 // loop_footer_branch
      %16 = sbr.rel target = $region3
    $region8: #{tpu_custom_call.1} parent=1 // loop_exit
      _
    %436 = vsyncpa [#allocation3], 1
    %s437 = scalar_lea.sflag [#allocation3], 1
    %438 = vsyncpa %s437, 1
    %439 = vsyncpa [#allocation4], 1
    %s440 = scalar_lea.sflag [#allocation4], 1
    %441 = vsyncpa %s440, 1

</llo_original>
